<compile_context>
chip_gen: v6e
topology: v6e:2x2x1
jax: 0.10.0
libtpu: 0.0.40
codegen_flags: <defaults>
</compile_context>

<pallas_src>
import jax
import jax.numpy as jnp
from jax.experimental import pallas as pl
from jax.experimental.pallas import tpu as pltpu


def _round_up(x, m):
    return ((x + m - 1) // m) * m


# ---------------------------------------------------------------------------
# Fused path: embedding gather + masked mean pool + projection in one kernel.
# ---------------------------------------------------------------------------
def _fused_embed_pool_project_kernel(ids_ref, mask_ref, table_ref, wt_ref, out_ref):
    # ids_ref  : (TB, S)  int32 token ids
    # mask_ref : (TB, S)  f32 attention mask
    # table_ref: (Vp, D)  f32 embedding table (resident; padded rows are zero)
    # wt_ref   : (D, D)   f32 projection weight, pre-transposed to (D_in, D_out)
    # out_ref  : (TB, D)  pooled + projected sentence embeddings
    ids = ids_ref[...]
    m = mask_ref[...]
    tb, s = ids.shape
    vp = table_ref.shape[0]

    # Masked one-hot counts: counts[b, v] = sum_s m[b, s] * (ids[b, s] == v).
    iota_v = jax.lax.broadcasted_iota(jnp.int32, (tb, s, vp), 2)
    onehot = (ids[:, :, None] == iota_v).astype(jnp.float32)          # (TB, S, Vp)
    counts = jnp.sum(onehot * m[:, :, None], axis=1)                  # (TB, Vp)

    # Masked sum of token embeddings as a single MXU matmul: (TB,Vp) @ (Vp,D).
    pooled_sum = jnp.dot(counts, table_ref[...],
                         preferred_element_type=jnp.float32)          # (TB, D)

    # Mean with PyTorch-style clamp(min=1e-9).  Exact reciprocal; padded rows
    # (all-zero mask) give pooled_sum == 0, so 0 * 1e9 == 0 exactly.
    valid = jnp.sum(m, axis=1, keepdims=True)                         # (TB, 1)
    inv = pl.reciprocal(jnp.maximum(valid, 1e-9), approx=False)
    pooled = pooled_sum * inv

    # Bias-free projection on the pooled tile only: (TB, D) @ (D, D).
    out_ref[...] = jnp.dot(pooled, wt_ref[...],
                           preferred_element_type=jnp.float32).astype(out_ref.dtype)


def _infer_fused(input_ids, attention_mask, embedding_table, proj_weight):
    B, S = input_ids.shape
    V, D = embedding_table.shape

    # Pad the vocab with zero rows so the MXU contraction / table sublanes are
    # aligned; ids never index the padded rows so results are unchanged.
    Vp = max(_round_up(V, 128), 128)
    table = embedding_table.astype(jnp.float32)
    if Vp != V:
        table = jnp.pad(table, ((0, Vp - V), (0, 0)))
    wt = proj_weight.astype(jnp.float32).T                            # (D_in, D_out)

    # Batch tile: sublane-aligned, bounded by the (TB, S, Vp) one-hot
    # intermediate, and capped so the grid has >= 2 steps when B allows it
    # (v7x megacore sharding + pipelining).
    onehot_budget = 2 * 1024 * 1024
    tb = max(8, min(256, onehot_budget // max(1, S * Vp * 4)))
    tb = max(8, (tb // 8) * 8)
    B8 = _round_up(B, 8)
    if B8 >= 16:
        tb = min(tb, max(8, ((B8 // 2) // 8) * 8))
    block_b = min(tb, B8)

    # Pad ONLY the tiny per-token inputs; padded rows are fully masked.
    Bp = _round_up(B, block_b)
    ids = input_ids.astype(jnp.int32)
    mask = attention_mask.astype(jnp.float32)
    if Bp != B:
        ids = jnp.pad(ids, ((0, Bp - B), (0, 0)))
        mask = jnp.pad(mask, ((0, Bp - B), (0, 0)))

    # VMEM budget: resident table + weight, pipelined ids/mask/out tiles, plus
    # headroom for the one-hot intermediate.  Never clamped below the footprint.
    tile_bytes = (2 * Vp * D * 4                  # table
                  + 2 * D * D * 4                 # projection weight
                  + 2 * block_b * S * 4 * 2       # ids + mask tiles
                  + 2 * block_b * D * 4           # output tile
                  + block_b * S * Vp * 4)         # one-hot headroom
    vmem_limit = int(max(tile_bytes + (4 << 20), 16 << 20))

    out = pl.pallas_call(
        _fused_embed_pool_project_kernel,
        out_shape=jax.ShapeDtypeStruct((Bp, D), jnp.float32),
        grid_spec=pltpu.PrefetchScalarGridSpec(
            num_scalar_prefetch=0,
            grid=(Bp // block_b,),
            in_specs=[
                pl.BlockSpec((block_b, S), lambda b: (b, 0)),
                pl.BlockSpec((block_b, S), lambda b: (b, 0)),
                # Resident across the whole grid (constant block index).
                pl.BlockSpec((Vp, D), lambda b: (0, 0)),
                pl.BlockSpec((D, D), lambda b: (0, 0)),
            ],
            out_specs=pl.BlockSpec((block_b, D), lambda b: (b, 0)),
        ),
        compiler_params=pltpu.CompilerParams(
            dimension_semantics=("parallel",),
            vmem_limit_bytes=vmem_limit,
        ),
    )(ids, mask, table, wt)
    return out[:B]


# ---------------------------------------------------------------------------
# Fallback path (large vocab): XLA gather + pool/project kernel.
# ---------------------------------------------------------------------------
def _pool_project_kernel(emb_ref, mask_ref, wt_ref, out_ref):
    # emb_ref : (TB, S, D) token embeddings in their native dtype (e.g. bf16)
    # mask_ref: (TB, S)    f32 attention mask
    # wt_ref  : (D, D)     f32 pre-transposed projection weight
    # out_ref : (TB, D)    f32 output
    x = emb_ref[...].astype(jnp.float32)          # in-kernel cast, hidden under DMA
    m = mask_ref[...]
    pooled_sum = jnp.sum(x * m[:, :, None], axis=1)                   # (TB, D)
    valid = jnp.sum(m, axis=1, keepdims=True)
    inv = pl.reciprocal(jnp.maximum(valid, 1e-9), approx=False)
    out_ref[...] = jnp.dot(pooled_sum * inv, wt_ref[...],
                           preferred_element_type=jnp.float32).astype(out_ref.dtype)


def _infer_pooled(input_ids, attention_mask, embedding_table, proj_weight):
    # TODO(synk): replace the XLA gather with an in-kernel manual DMA row gather
    #             (pl.ANY table + scalar-prefetched ids) so the (B,S,D) stream
    #             never round-trips HBM; and add an S ("arbitrary") grid axis
    #             with a VMEM accumulator for very large S*D on v7x.
    B, S = input_ids.shape
    V, D = embedding_table.shape
    bytes_per = jnp.dtype(embedding_table.dtype).itemsize
    wt = proj_weight.astype(jnp.float32).T

    # Sublane-aligned batch tile: double-buffered (TB,S,D) stream <= ~32 MiB
    # (fits v7x's 64 MiB VMEM; bigger steps get closer to HBM roofline on
    # v5e/v6e), with >= 2 grid steps when the batch allows it.
    row_bytes = S * D * bytes_per
    tb = max(8, min(512, (32 * 1024 * 1024) // max(1, 2 * row_bytes)))
    tb = max(8, (tb // 8) * 8)
    B8 = _round_up(B, 8)
    if B8 >= 16:
        tb = min(tb, max(8, ((B8 // 2) // 8) * 8))
    block_b = min(tb, B8)

    # Pad ONLY the tiny ids/mask BEFORE the gather; never pad the big tensor.
    Bp = _round_up(B, block_b)
    ids = input_ids.astype(jnp.int32)
    mask = attention_mask.astype(jnp.float32)
    if Bp != B:
        ids = jnp.pad(ids, ((0, Bp - B), (0, 0)))
        mask = jnp.pad(mask, ((0, Bp - B), (0, 0)))
    token_embeddings = jnp.take(embedding_table, ids, axis=0)         # (Bp,S,D) native dtype

    tile_bytes = (2 * block_b * S * D * bytes_per
                  + 2 * block_b * S * 4
                  + 2 * D * D * 4
                  + 2 * block_b * D * 4)
    vmem_limit = int(max(tile_bytes + (4 << 20), 16 << 20))

    out = pl.pallas_call(
        _pool_project_kernel,
        out_shape=jax.ShapeDtypeStruct((Bp, D), jnp.float32),
        grid_spec=pltpu.PrefetchScalarGridSpec(
            num_scalar_prefetch=0,
            grid=(Bp // block_b,),
            in_specs=[
                pl.BlockSpec((block_b, S, D), lambda b: (b, 0, 0)),
                pl.BlockSpec((block_b, S), lambda b: (b, 0)),
                pl.BlockSpec((D, D), lambda b: (0, 0)),
            ],
            out_specs=pl.BlockSpec((block_b, D), lambda b: (b, 0)),
        ),
        compiler_params=pltpu.CompilerParams(
            dimension_semantics=("parallel",),
            vmem_limit_bytes=vmem_limit,
        ),
    )(token_embeddings, mask, wt)
    return out[:B]


# ---------------------------------------------------------------------------
# Public API: ASTValueEmbedding.infer_inputs
# ---------------------------------------------------------------------------
def ast_value_embedding_infer(input_ids, attention_mask, embedding_table, proj_weight):
    """infer_inputs: masked mean pool of projected token embeddings.

    Pool-then-project commutation requires the projection to be bias-free
    (the module uses nn.Linear(..., bias=False)) and the mask to be per-token
    scalars -- guarded below."""
    V, D = embedding_table.shape
    assert proj_weight.shape == (D, D), (
        "proj must be a square, bias-free Linear for pool-then-project to be valid")
    S = input_ids.shape[1]
    Vp = max(_round_up(V, 128), 128)
    fits_table = Vp * D * 4 <= 8 * 1024 * 1024          # table resident in VMEM
    fits_onehot = 8 * S * Vp * 4 <= 2 * 1024 * 1024     # one-hot tile at block_b=8
    if fits_table and fits_onehot:
        return _infer_fused(input_ids, attention_mask, embedding_table, proj_weight)
    return _infer_pooled(input_ids, attention_mask, embedding_table, proj_weight)


if __name__ == "__main__":
    # TODO(synk): PreTrainedTokenizerFast string handling in forward() is host-side
    #             preprocessing with no TPU-kernel equivalent; we start from integer
    #             input_ids (i.e. infer_inputs).
    vocab_size = 64
    embedding_dim = 128   # module default
    B, S = 16, 8          # 16 rows -> 2 grid steps of TB=8 (sublane-aligned)

    key = jax.random.PRNGKey(0)
    k_emb, k_proj, k_ids = jax.random.split(key, 3)

    # nn.Embedding weight ~ N(0,1); nn.Linear weight ~ U(-1/sqrt(fan_in), 1/sqrt(fan_in))
    embedding_table = jax.random.normal(
        k_emb, (vocab_size, embedding_dim), dtype=jnp.float32)
    bound = 1.0 / (embedding_dim ** 0.5)
    proj_weight = jax.random.uniform(
        k_proj, (embedding_dim, embedding_dim), minval=-bound, maxval=bound,
        dtype=jnp.float32)  # PyTorch Linear weight layout (out, in), bias=False

    input_ids = jax.random.randint(k_ids, (B, S), 0, vocab_size, dtype=jnp.int32)
    # Deterministic variable-length padding: row i has (i % S) + 1 valid tokens.
    lengths = (jnp.arange(B) % S) + 1
    attention_mask = (jnp.arange(S)[None, :] < lengths[:, None]).astype(jnp.float32)

    out = ast_value_embedding_infer(input_ids, attention_mask, embedding_table,
                                    proj_weight)
    out = jax.block_until_ready(out)

    # Pure-JAX reference in the ORIGINAL order (project -> mask -> sum -> divide),
    # mirroring PyTorch infer_inputs exactly, to validate the commuted/fused kernel.
    tok = jnp.take(embedding_table, input_ids, axis=0)                # (B, S, D)
    proj = jnp.einsum("bsd,ed->bse", tok, proj_weight,
                      precision=jax.lax.Precision.HIGHEST)            # Linear: x @ W.T
    masked = proj * attention_mask[:, :, None]
    summed = masked.sum(axis=1)
    valid = attention_mask.sum(axis=1, keepdims=True)
    ref = summed / jnp.maximum(valid, 1e-9)

    assert out.shape == (B, embedding_dim)
    # Tolerance covers MXU f32-matmul rounding modes on both sides; logic errors
    # would be orders of magnitude larger.
    assert jnp.allclose(out, ref, rtol=5e-3, atol=5e-3), (
        f"max abs err {jnp.max(jnp.abs(out - ref))}")
    print("KERNEL_OK")
</pallas_src>

<mosaic_0001>
module attributes {stable_mosaic.version = 11 : i64} {
  func.func @_fused_embed_pool_project_kernel(%arg0: i32, %arg1: memref<8x8xi32, #tpu.memory_space<vmem>>, %arg2: memref<8x8xf32, #tpu.memory_space<vmem>>, %arg3: memref<128x128xf32, #tpu.memory_space<vmem>>, %arg4: memref<128x128xf32, #tpu.memory_space<vmem>>, %arg5: memref<8x128xf32, #tpu.memory_space<vmem>>) attributes {dimension_semantics = [#tpu.dimension_semantics<parallel>], iteration_bounds = array<i64: 2>, scalar_prefetch = 0 : i64, scratch_operands = 0 : i64, tpu.core_type = #tpu.core_type<tc>, window_params = [{transform_indices = @transform_0, window_bounds = array<i64: 8, 8>}, {transform_indices = @transform_1, window_bounds = array<i64: 8, 8>}, {pipeline_mode = #tpu.pipeline_mode<synchronous>, transform_indices = @transform_2, window_bounds = array<i64: 128, 128>}, {pipeline_mode = #tpu.pipeline_mode<synchronous>, transform_indices = @transform_3, window_bounds = array<i64: 128, 128>}, {transform_indices = @transform_4, window_bounds = array<i64: 8, 128>}]} {
    %c0 = arith.constant 0 : index
    %c0_0 = arith.constant 0 : index
    %0 = vector.load %arg1[%c0, %c0_0] : memref<8x8xi32, #tpu.memory_space<vmem>>, vector<8x8xi32>
    %c0_1 = arith.constant 0 : index
    %c0_2 = arith.constant 0 : index
    %1 = vector.load %arg2[%c0_1, %c0_2] : memref<8x8xf32, #tpu.memory_space<vmem>>, vector<8x8xf32>
    %2 = tpu.iota {dimensions = array<i32: 2>} : vector<8x8x128xi32>
    %3 = vector.shape_cast %0 : vector<8x8xi32> to vector<8x8x1xi32>
    %4 = vector.broadcast %3 : vector<8x8x1xi32> to vector<8x8x128xi32>
    %5 = arith.cmpi eq, %4, %2 : vector<8x8x128xi32>
    %6 = arith.extui %5 : vector<8x8x128xi1> to vector<8x8x128xi32>
    %7 = arith.sitofp %6 : vector<8x8x128xi32> to vector<8x8x128xf32>
    %8 = vector.shape_cast %1 : vector<8x8xf32> to vector<8x8x1xf32>
    %9 = vector.broadcast %8 : vector<8x8x1xf32> to vector<8x8x128xf32>
    %10 = arith.mulf %7, %9 : vector<8x8x128xf32>
    %cst = arith.constant dense<0.000000e+00> : vector<8x128xf32>
    %11 = vector.multi_reduction <add>, %10, %cst [1] : vector<8x8x128xf32> to vector<8x128xf32>
    %c0_3 = arith.constant 0 : index
    %c0_4 = arith.constant 0 : index
    %12 = vector.load %arg3[%c0_3, %c0_4] : memref<128x128xf32, #tpu.memory_space<vmem>>, vector<128x128xf32>
    %cst_5 = arith.constant dense<0.000000e+00> : vector<8x128xf32>
    %13 = tpu.matmul %11, %12, %cst_5 {dimension_numbers = #tpu.dot_dimension_numbers<[1], [0], [0], [1], [0, 0, 1, 1], [], []>} : vector<8x128xf32>, vector<128x128xf32>, vector<8x128xf32> -> vector<8x128xf32>
    %cst_6 = arith.constant dense<0.000000e+00> : vector<8xf32>
    %14 = vector.multi_reduction <add>, %1, %cst_6 [1] : vector<8x8xf32> to vector<8xf32>
    %15 = vector.shape_cast %14 : vector<8xf32> to vector<8x1xf32>
    %cst_7 = arith.constant 9.99999971E-10 : f32
    %16 = vector.broadcast %cst_7 : f32 to vector<8x1xf32>
    %17 = arith.maximumf %15, %16 : vector<8x1xf32>
    %18 = tpu.reciprocal %17 : vector<8x1xf32> -> vector<8x1xf32>
    %19 = vector.broadcast %18 : vector<8x1xf32> to vector<8x128xf32>
    %20 = arith.mulf %13, %19 : vector<8x128xf32>
    %c0_8 = arith.constant 0 : index
    %c0_9 = arith.constant 0 : index
    %21 = vector.load %arg4[%c0_8, %c0_9] : memref<128x128xf32, #tpu.memory_space<vmem>>, vector<128x128xf32>
    %cst_10 = arith.constant dense<0.000000e+00> : vector<8x128xf32>
    %22 = tpu.matmul %20, %21, %cst_10 {dimension_numbers = #tpu.dot_dimension_numbers<[1], [0], [0], [1], [0, 0, 1, 1], [], []>} : vector<8x128xf32>, vector<128x128xf32>, vector<8x128xf32> -> vector<8x128xf32>
    %c0_11 = arith.constant 0 : index
    %c0_12 = arith.constant 0 : index
    %23 = vector.load %arg5[%c0_11, %c0_12] : memref<8x128xf32, #tpu.memory_space<vmem>>, vector<8x128xf32>
    tpu.vector_store %arg5[%c0_11, %c0_12], %22 {strides = array<i32>} : memref<8x128xf32, #tpu.memory_space<vmem>>, vector<8x128xf32>,
    return
  }
  func.func @transform_0(%arg0: i32) -> (i32, i32) {
    %c0_i32 = arith.constant 0 : i32
    %c0_i32_0 = arith.constant 0 : i32
    return %arg0, %c0_i32 : i32, i32
  }
  func.func @transform_1(%arg0: i32) -> (i32, i32) {
    %c0_i32 = arith.constant 0 : i32
    %c0_i32_0 = arith.constant 0 : i32
    return %arg0, %c0_i32 : i32, i32
  }
  func.func @transform_2(%arg0: i32) -> (i32, i32) {
    %c0_i32 = arith.constant 0 : i32
    %c0_i32_0 = arith.constant 0 : i32
    %c0_i32_1 = arith.constant 0 : i32
    return %c0_i32, %c0_i32_0 : i32, i32
  }
  func.func @transform_3(%arg0: i32) -> (i32, i32) {
    %c0_i32 = arith.constant 0 : i32
    %c0_i32_0 = arith.constant 0 : i32
    %c0_i32_1 = arith.constant 0 : i32
    return %c0_i32, %c0_i32_0 : i32, i32
  }
  func.func @transform_4(%arg0: i32) -> (i32, i32) {
    %c0_i32 = arith.constant 0 : i32
    %c0_i32_0 = arith.constant 0 : i32
    return %arg0, %c0_i32 : i32, i32
  }
}

</mosaic_0001>

<llo_original>
// kernel: tpu_custom_call.1
$region0: #{tpu_custom_call.1}
  #allocation0 [shape = 'u32[]', space=smem, size = 0x4, offset = 0x4, fixed_abs, tag = 'smem constant byte address 0x4 - core index']
  #allocation1 [shape = 'u32[144,128]{1,0:T(1,128)}', space=vmem, size = 0x12000, scoped, tag = 'internal scratch']
  %s0 = inlined_call_operand.vmem [shape: s32[16,8], index: 0, kind: input, shape index: {}]
  %s1 = inlined_call_operand.vmem [shape: f32[16,8], index: 1, kind: input, shape index: {}]
  %s2 = inlined_call_operand.hbm [shape: f32[128,128], index: 2, kind: input, shape index: {}]
  %s3 = inlined_call_operand.hbm [shape: f32[128,128], index: 3, kind: input, shape index: {}]
  %s4 = inlined_call_operand.hbm [shape: f32[16,128], index: 4, kind: output, shape index: {}]
  %s5 = sld [smem:[#allocation0]]
  $region57: #{tpu_custom_call.1} parent=0
    _
  %s7 = ssub.s32 1, %s5
  %s8 = scalar_select 0, %s7, %s5
  $region1: #{tpu_custom_call.1} parent=0
    #allocation2 [shape = 'u8[65536]{0}', space=vmem, size = 0x10000, scoped, tag = 'input window, operand 2, single buffered']
    #allocation3 [shape = 's32[2]{0}', space=sflag, size = 0x8, scoped, tag = 'scoped memory for tpu_custom_call.1']
    #allocation4 [shape = 's32[2]{0}', space=sflag, size = 0x8, scoped, tag = 'scoped memory for tpu_custom_call.1']
    #allocation5 [shape = 'u8[65536]{0}', space=vmem, size = 0x10000, scoped, tag = 'input window, operand 3, single buffered']
    #allocation6 [shape = 's32[1]{0}', space=sflag, size = 0x4, scoped, tag = 'scoped memory for tpu_custom_call.1']
    #allocation7 [shape = 'u8[8192]{0}', space=vmem, size = 0x2000, scoped, tag = 'output window, operand 0']
    %9 = vsyncpa [#allocation3], 0
    %10 = vsyncpa [#allocation6], 0
    %11 = vsyncpa [#allocation4], 0
    %s12 = scalar_lea.sflag [#allocation4], 1
    %13 = vsyncpa %s12, 0
    loop: start=0, step=1, limit=4
    $region2: #{tpu_custom_call.1} parent=1 // loop_pre_header
      _
    $region3: #{tpu_custom_call.1} parent=1 // loop_header
      %s15 = sphi 0, %s19
      %p16 = scmp.ge.s32.totalorder %s15, 4
      %s25 = sphi 0, %s27
      %s28 = sphi 0, %s25
      %s29 = sphi 0, %s28
      %s45 = sphi 0, %s29
      %s51 = sphi 0, %s53
      %s54 = sphi 0, %s51
      %s55 = sphi 0, %s54
      %s71 = sphi 0, %s55
      %s75 = sphi 0, %s75
      %s77 = sphi 0, %s75
      %s78 = sphi 0, %s77
      %s92 = sphi 0, %s78
      %s96 = sphi 0, %s96
      %s98 = sphi 0, %s96
      %s99 = sphi 0, %s98
      %s113 = sphi 0, %s99
      %s119 = sphi 0, %s121
      %s122 = sphi 0, %s119
      %s123 = sphi 0, %s122
      %s139 = sphi 0, %s123
    $region4: #{tpu_custom_call.1} parent=1 // loop_header_branch
      %18 = sbr.rel (%p16) target = $region8
    $region5: #{tpu_custom_call.1} parent=1 // loop_body
      %s20 = ssub.s32 %s15, 1
      %s21 = ssub.s32 %s15, 2
      %s22 = sadd.s32 %s15, 1
      %s23 = ssub.s32 %s15, %s22
      %p24 = scmp.eq.s32.totalorder %s23, 0
      %s26 = sadd.s32 %s25, 1
      %s27 = scalar_select %p24, %s25, %s26
      %p30 = pneg %p24
      %p31 = scmp.eq.s32.totalorder %s15, 1
      %p32 = por %p30, %p31
      %p33 = scmp.ne.s32.totalorder %s25, %s28
      %p34 = scmp.eq.s32.totalorder %s15, 0
      %p35 = por %p33, %p34
      %p36 = scmp.ne.s32.totalorder %s25, %s28
      %p37 = scmp.eq.s32.totalorder %s20, 1
      %p38 = por %p36, %p37
      %p39 = scmp.ne.s32.totalorder %s28, %s29
      %p40 = scmp.eq.s32.totalorder %s20, 0
      %p41 = por %p39, %p40
      %p42 = scmp.ne.s32.totalorder %s28, %s29
      %p43 = scmp.eq.s32.totalorder %s21, 1
      %p44 = por %p42, %p43
      %p46 = scmp.ne.s32.totalorder %s29, %s45
      %p47 = scmp.eq.s32.totalorder %s21, 0
      %p48 = por %p46, %p47
      %s49 = ssub.s32 %s15, %s22
      %p50 = scmp.eq.s32.totalorder %s49, 0
      %s52 = sadd.s32 %s51, 1
      %s53 = scalar_select %p50, %s51, %s52
      %p56 = pneg %p50
      %p57 = scmp.eq.s32.totalorder %s15, 1
      %p58 = por %p56, %p57
      %p59 = scmp.ne.s32.totalorder %s51, %s54
      %p60 = scmp.eq.s32.totalorder %s15, 0
      %p61 = por %p59, %p60
      %p62 = scmp.ne.s32.totalorder %s51, %s54
      %p63 = scmp.eq.s32.totalorder %s20, 1
      %p64 = por %p62, %p63
      %p65 = scmp.ne.s32.totalorder %s54, %s55
      %p66 = scmp.eq.s32.totalorder %s20, 0
      %p67 = por %p65, %p66
      %p68 = scmp.ne.s32.totalorder %s54, %s55
      %p69 = scmp.eq.s32.totalorder %s21, 1
      %p70 = por %p68, %p69
      %p72 = scmp.ne.s32.totalorder %s55, %s71
      %p73 = scmp.eq.s32.totalorder %s21, 0
      %p74 = por %p72, %p73
      %s76 = sadd.s32 %s75, 1
      %p79 = scmp.eq.s32.totalorder %s15, 1
      %p80 = scmp.ne.s32.totalorder %s75, %s77
      %p81 = scmp.eq.s32.totalorder %s15, 0
      %p82 = por %p80, %p81
      %p83 = scmp.ne.s32.totalorder %s75, %s77
      %p84 = scmp.eq.s32.totalorder %s20, 1
      %p85 = por %p83, %p84
      %p86 = scmp.ne.s32.totalorder %s77, %s78
      %p87 = scmp.eq.s32.totalorder %s20, 0
      %p88 = por %p86, %p87
      %p89 = scmp.ne.s32.totalorder %s77, %s78
      %p90 = scmp.eq.s32.totalorder %s21, 1
      %p91 = por %p89, %p90
      %p93 = scmp.ne.s32.totalorder %s78, %s92
      %p94 = scmp.eq.s32.totalorder %s21, 0
      %p95 = por %p93, %p94
      %s97 = sadd.s32 %s96, 1
      %p100 = scmp.eq.s32.totalorder %s15, 1
      %p101 = scmp.ne.s32.totalorder %s96, %s98
      %p102 = scmp.eq.s32.totalorder %s15, 0
      %p103 = por %p101, %p102
      %p104 = scmp.ne.s32.totalorder %s96, %s98
      %p105 = scmp.eq.s32.totalorder %s20, 1
      %p106 = por %p104, %p105
      %p107 = scmp.ne.s32.totalorder %s98, %s99
      %p108 = scmp.eq.s32.totalorder %s20, 0
      %p109 = por %p107, %p108
      %p110 = scmp.ne.s32.totalorder %s98, %s99
      %p111 = scmp.eq.s32.totalorder %s21, 1
      %p112 = por %p110, %p111
      %p114 = scmp.ne.s32.totalorder %s99, %s113
      %p115 = scmp.eq.s32.totalorder %s21, 0
      %p116 = por %p114, %p115
      %s117 = ssub.s32 %s15, %s22
      %p118 = scmp.eq.s32.totalorder %s117, 0
      %s120 = sadd.s32 %s119, 1
      %s121 = scalar_select %p118, %s119, %s120
      %p124 = pneg %p118
      %p125 = scmp.eq.s32.totalorder %s15, 1
      %p126 = por %p124, %p125
      %p127 = scmp.ne.s32.totalorder %s119, %s122
      %p128 = scmp.eq.s32.totalorder %s15, 0
      %p129 = por %p127, %p128
      %p130 = scmp.ne.s32.totalorder %s119, %s122
      %p131 = scmp.eq.s32.totalorder %s20, 1
      %p132 = por %p130, %p131
      %p133 = scmp.ne.s32.totalorder %s122, %s123
      %p134 = scmp.eq.s32.totalorder %s20, 0
      %p135 = por %p133, %p134
      %p136 = scmp.ne.s32.totalorder %s122, %s123
      %p137 = scmp.eq.s32.totalorder %s21, 1
      %p138 = por %p136, %p137
      %p140 = scmp.ne.s32.totalorder %s123, %s139
      %p141 = scmp.eq.s32.totalorder %s21, 0
      %p142 = por %p140, %p141
      %p143 = scmp.le.s32.totalorder 1, %s15
      %p144 = scmp.lt.s32.totalorder %s15, 3
      %p145 = pnand %p143, %p144
      %p146 = pneg %p145
      // Predicated region
      $region9: #{tpu_custom_call.1} parent=5 // pred_check
        _
      $region10: #{tpu_custom_call.1} parent=5 // pred_check_branch
        %148 = sbr.rel (%p145) target = $region12
      $region11: #{tpu_custom_call.1} parent=5 // pred_region
        %s149 = ssub.s32 %s15, 1
        // Predicated region
        $region13: #{tpu_custom_call.1} parent=11 // pred_check
          %p150 = pneg %p88
        $region14: #{tpu_custom_call.1} parent=11 // pred_check_branch
          %152 = sbr.rel (%p150) target = $region16
        $region15: #{tpu_custom_call.1} parent=11 // pred_region
          %s154 = ssub.s32 2048, 2048
          %155 = vsyncadd [#allocation3], %s154
          %s156 = sshll.u32 [#allocation2], 4
          %s157 = int_to_ptr.vmem [resolvable:$true] %s156
          %162 = dma.hbm_to_vmem [thread:$0]  %s2, 2048, %s157, [#allocation3], 128, 128, 8
        $region16: #{tpu_custom_call.1} parent=11 // pred_fallthru
          _
        // Predicated region
        $region17: #{tpu_custom_call.1} parent=11 // pred_check
          %p163 = pneg %p109
        $region18: #{tpu_custom_call.1} parent=11 // pred_check_branch
          %165 = sbr.rel (%p163) target = $region20
        $region19: #{tpu_custom_call.1} parent=11 // pred_region
          %s167 = ssub.s32 2048, 2048
          %168 = vsyncadd [#allocation6], %s167
          %s169 = sshll.u32 [#allocation5], 4
          %s170 = int_to_ptr.vmem [resolvable:$true] %s169
          %175 = dma.hbm_to_vmem [thread:$0]  %s3, 2048, %s170, [#allocation6], 128, 128, 8
        $region20: #{tpu_custom_call.1} parent=11 // pred_fallthru
          _
      $region12: #{tpu_custom_call.1} parent=5 // pred_fallthru
        _
      %p176 = scmp.lt.s32.totalorder %s15, 2
      // Predicated region
      $region21: #{tpu_custom_call.1} parent=5 // pred_check
        %p177 = pneg %p176
      $region22: #{tpu_custom_call.1} parent=5 // pred_check_branch
        %179 = sbr.rel (%p177) target = $region24
      $region23: #{tpu_custom_call.1} parent=5 // pred_region
        // Predicated region
        $region25: #{tpu_custom_call.1} parent=23 // pred_check
          %p180 = pneg %p35
        $region26: #{tpu_custom_call.1} parent=23 // pred_check_branch
          %182 = sbr.rel (%p180) target = $region28
        $region27: #{tpu_custom_call.1} parent=23 // pred_region
          %p183 = scmp.lt.s32.totalorder %s15, 1
          %s184 = scalar_select %p183, %s15, 1
          %s185 = smul.addr %s184, 8
          %s186 = scalar_lea.vmem %s0, %s185
        $region28: #{tpu_custom_call.1} parent=23 // pred_fallthru
          _
        // Predicated region
        $region29: #{tpu_custom_call.1} parent=23 // pred_check
          %p187 = pneg %p61
        $region30: #{tpu_custom_call.1} parent=23 // pred_check_branch
          %189 = sbr.rel (%p187) target = $region32
        $region31: #{tpu_custom_call.1} parent=23 // pred_region
          %p190 = scmp.lt.s32.totalorder %s15, 1
          %s191 = scalar_select %p190, %s15, 1
          %s192 = smul.addr %s191, 8
          %s193 = scalar_lea.vmem %s1, %s192
        $region32: #{tpu_custom_call.1} parent=23 // pred_fallthru
          _
      $region24: #{tpu_custom_call.1} parent=5 // pred_fallthru
        _
      %p194 = scmp.le.s32.totalorder 1, %s15
      %p195 = scmp.lt.s32.totalorder %s15, 3
      %p196 = pnand %p194, %p195
      %p197 = pneg %p196
      // Predicated region
      $region33: #{tpu_custom_call.1} parent=5 // pred_check
        _
      $region34: #{tpu_custom_call.1} parent=5 // pred_check_branch
        %199 = sbr.rel (%p196) target = $region36
      $region35: #{tpu_custom_call.1} parent=5 // pred_region
        %s200 = ssub.s32 %s15, 1
        // Predicated region
        $region37: #{tpu_custom_call.1} parent=35 // pred_check
          %p201 = pneg %p88
        $region38: #{tpu_custom_call.1} parent=35 // pred_check_branch
          %203 = sbr.rel (%p201) target = $region40
        $region39: #{tpu_custom_call.1} parent=35 // pred_region
          %204 = dma.done [#allocation3], 2048
        $region40: #{tpu_custom_call.1} parent=35 // pred_fallthru
          _
        // Predicated region
        $region41: #{tpu_custom_call.1} parent=35 // pred_check
          %p205 = pneg %p109
        $region42: #{tpu_custom_call.1} parent=35 // pred_check_branch
          %207 = sbr.rel (%p205) target = $region44
        $region43: #{tpu_custom_call.1} parent=35 // pred_region
          %208 = dma.done [#allocation6], 2048
        $region44: #{tpu_custom_call.1} parent=35 // pred_fallthru
          _
        %p209 = scmp.lt.s32.totalorder %s20, 1
        %s210 = scalar_select %p209, %s20, 1
        %s211 = smul.addr %s210, 8
        %s212 = scalar_lea.vmem %s0, %s211
        %p213 = pneg %p41
        %p214 = pneg %p38
        %p215 = scmp.lt.s32.totalorder %s20, 1
        %s216 = scalar_select %p215, %s20, 1
        %s217 = smul.addr %s216, 8
        %s218 = scalar_lea.vmem %s1, %s217
        %p219 = pneg %p67
        %p220 = pneg %p64
        %p221 = pneg %p88
        %p222 = pneg %p85
        %p223 = pneg %p109
        %p224 = pneg %p106
        %p225 = pneg %p135
        %p226 = pneg %p132
        %s227 = sand.u32 %s122, 1
        %s228 = scalar_lea.sflag [#allocation4], %s227
        %s229 = sand.u32 %s122, 1
        %s230 = smul.addr %s229, 8
        %s231 = scalar_lea.vmem [#allocation7], %s230
        %p232 = scmp.lt.s32.totalorder %s20, 1
        %s233 = scalar_select %p232, %s20, 1
        %s234 = smul.addr %s233, 8
        %s235 = scalar_lea.vmem %s0, %s234
        %p236 = scmp.lt.s32.totalorder %s20, 1
        %s237 = scalar_select %p236, %s20, 1
        %s238 = smul.addr %s237, 8
        %s239 = scalar_lea.vmem %s1, %s238
        %v240 = vld [vmem:[%s235] sm:$0xff]
        %v241 = vld [vmem:[%s239] sm:$0xff]
        %v242 = vlaneseq
        %v243 = vand.u32 %v242, 127
        %v244 = vlaneseq
        %v245 = vshrl.u32 %v244, 7
        %v246 = vsub.s32 0, %v245
        %v247 = vrot.slane %v240, %v246
        %249 = vbcast.lane.b32.xlu0 %v247, 256
        %v250 = vpop.permute.xlu0 %249
        %v251 = vlaneseq
        %v252 = vshrl.u32 %v251, 7
        %v253 = vsub.s32 1, %v252
        %v254 = vrot.slane %v240, %v253
        %256 = vbcast.lane.b32.xlu0 %v254, 256
        %v257 = vpop.permute.xlu0 %256
        %v258 = vlaneseq
        %v259 = vshrl.u32 %v258, 7
        %v260 = vsub.s32 2, %v259
        %v261 = vrot.slane %v240, %v260
        %263 = vbcast.lane.b32.xlu0 %v261, 256
        %v264 = vpop.permute.xlu0 %263
        %v265 = vlaneseq
        %v266 = vshrl.u32 %v265, 7
        %v267 = vsub.s32 3, %v266
        %v268 = vrot.slane %v240, %v267
        %270 = vbcast.lane.b32.xlu0 %v268, 256
        %v271 = vpop.permute.xlu0 %270
        %v272 = vlaneseq
        %v273 = vshrl.u32 %v272, 7
        %v274 = vsub.s32 4, %v273
        %v275 = vrot.slane %v240, %v274
        %277 = vbcast.lane.b32.xlu0 %v275, 256
        %v278 = vpop.permute.xlu0 %277
        %v279 = vlaneseq
        %v280 = vshrl.u32 %v279, 7
        %v281 = vsub.s32 5, %v280
        %v282 = vrot.slane %v240, %v281
        %284 = vbcast.lane.b32.xlu0 %v282, 256
        %v285 = vpop.permute.xlu0 %284
        %v286 = vlaneseq
        %v287 = vshrl.u32 %v286, 7
        %v288 = vsub.s32 6, %v287
        %v289 = vrot.slane %v240, %v288
        %291 = vbcast.lane.b32.xlu0 %v289, 256
        %v292 = vpop.permute.xlu0 %291
        %v293 = vlaneseq
        %v294 = vshrl.u32 %v293, 7
        %v295 = vsub.s32 7, %v294
        %v296 = vrot.slane %v240, %v295
        %298 = vbcast.lane.b32.xlu0 %v296, 256
        %v299 = vpop.permute.xlu0 %298
        %vm300 = vcmp.eq.s32.totalorder %v250, %v243
        %vm301 = vcmp.eq.s32.totalorder %v257, %v243
        %vm302 = vcmp.eq.s32.totalorder %v264, %v243
        %vm303 = vcmp.eq.s32.totalorder %v271, %v243
        %vm304 = vcmp.eq.s32.totalorder %v278, %v243
        %vm305 = vcmp.eq.s32.totalorder %v285, %v243
        %vm306 = vcmp.eq.s32.totalorder %v292, %v243
        %vm307 = vcmp.eq.s32.totalorder %v299, %v243
        %v308 = vsel %vm300, 1, 0
        %v309 = vsel %vm301, 1, 0
        %v310 = vsel %vm302, 1, 0
        %v311 = vsel %vm303, 1, 0
        %v312 = vsel %vm304, 1, 0
        %v313 = vsel %vm305, 1, 0
        %v314 = vsel %vm306, 1, 0
        %v315 = vsel %vm307, 1, 0
        %v316 = vcvt.s32.f32 %v308
        %v317 = vcvt.s32.f32 %v309
        %v318 = vcvt.s32.f32 %v310
        %v319 = vcvt.s32.f32 %v311
        %v320 = vcvt.s32.f32 %v312
        %v321 = vcvt.s32.f32 %v313
        %v322 = vcvt.s32.f32 %v314
        %v323 = vcvt.s32.f32 %v315
        %v324 = vlaneseq
        %v325 = vshrl.u32 %v324, 7
        %v326 = vsub.s32 0, %v325
        %v327 = vrot.slane %v241, %v326
        %329 = vbcast.lane.b32.xlu0 %v327, 256
        %v330 = vpop.permute.xlu0 %329
        %v331 = vlaneseq
        %v332 = vshrl.u32 %v331, 7
        %v333 = vsub.s32 1, %v332
        %v334 = vrot.slane %v241, %v333
        %336 = vbcast.lane.b32.xlu0 %v334, 256
        %v337 = vpop.permute.xlu0 %336
        %v338 = vlaneseq
        %v339 = vshrl.u32 %v338, 7
        %v340 = vsub.s32 2, %v339
        %v341 = vrot.slane %v241, %v340
        %343 = vbcast.lane.b32.xlu0 %v341, 256
        %v344 = vpop.permute.xlu0 %343
        %v345 = vlaneseq
        %v346 = vshrl.u32 %v345, 7
        %v347 = vsub.s32 3, %v346
        %v348 = vrot.slane %v241, %v347
        %350 = vbcast.lane.b32.xlu0 %v348, 256
        %v351 = vpop.permute.xlu0 %350
        %v352 = vlaneseq
        %v353 = vshrl.u32 %v352, 7
        %v354 = vsub.s32 4, %v353
        %v355 = vrot.slane %v241, %v354
        %357 = vbcast.lane.b32.xlu0 %v355, 256
        %v358 = vpop.permute.xlu0 %357
        %v359 = vlaneseq
        %v360 = vshrl.u32 %v359, 7
        %v361 = vsub.s32 5, %v360
        %v362 = vrot.slane %v241, %v361
        %364 = vbcast.lane.b32.xlu0 %v362, 256
        %v365 = vpop.permute.xlu0 %364
        %v366 = vlaneseq
        %v367 = vshrl.u32 %v366, 7
        %v368 = vsub.s32 6, %v367
        %v369 = vrot.slane %v241, %v368
        %371 = vbcast.lane.b32.xlu0 %v369, 256
        %v372 = vpop.permute.xlu0 %371
        %v373 = vlaneseq
        %v374 = vshrl.u32 %v373, 7
        %v375 = vsub.s32 7, %v374
        %v376 = vrot.slane %v241, %v375
        %378 = vbcast.lane.b32.xlu0 %v376, 256
        %v379 = vpop.permute.xlu0 %378
        %v380 = vmul.f32 %v316, %v330
        %v381 = vmul.f32 %v317, %v337
        %v382 = vmul.f32 %v318, %v344
        %v383 = vmul.f32 %v319, %v351
        %v384 = vmul.f32 %v320, %v358
        %v385 = vmul.f32 %v321, %v365
        %v386 = vmul.f32 %v322, %v372
        %v387 = vmul.f32 %v323, %v379
        %v388 = vrot.slane %v380, 4
        %v389 = vadd.f32 %v380, %v388
        %v390 = vrot.slane %v389, 2
        %v391 = vadd.f32 %v389, %v390
        %v392 = vrot.slane %v391, 1
        %v393 = vadd.f32 %v391, %v392
        %v394 = vrot.slane %v381, 4
        %v395 = vadd.f32 %v381, %v394
        %v396 = vrot.slane %v395, 2
        %v397 = vadd.f32 %v395, %v396
        %v398 = vrot.slane %v397, 1
        %v399 = vadd.f32 %v397, %v398
        %v400 = vrot.slane %v382, 4
        %v401 = vadd.f32 %v382, %v400
        %v402 = vrot.slane %v401, 2
        %v403 = vadd.f32 %v401, %v402
        %v404 = vrot.slane %v403, 1
        %v405 = vadd.f32 %v403, %v404
        %v406 = vrot.slane %v383, 4
        %v407 = vadd.f32 %v383, %v406
        %v408 = vrot.slane %v407, 2
        %v409 = vadd.f32 %v407, %v408
        %v410 = vrot.slane %v409, 1
        %v411 = vadd.f32 %v409, %v410
        %v412 = vrot.slane %v384, 4
        %v413 = vadd.f32 %v384, %v412
        %v414 = vrot.slane %v413, 2
        %v415 = vadd.f32 %v413, %v414
        %v416 = vrot.slane %v415, 1
        %v417 = vadd.f32 %v415, %v416
        %v418 = vrot.slane %v385, 4
        %v419 = vadd.f32 %v385, %v418
        %v420 = vrot.slane %v419, 2
        %v421 = vadd.f32 %v419, %v420
        %v422 = vrot.slane %v421, 1
        %v423 = vadd.f32 %v421, %v422
        %v424 = vrot.slane %v386, 4
        %v425 = vadd.f32 %v386, %v424
        %v426 = vrot.slane %v425, 2
        %v427 = vadd.f32 %v425, %v426
        %v428 = vrot.slane %v427, 1
        %v429 = vadd.f32 %v427, %v428
        %v430 = vrot.slane %v387, 4
        %v431 = vadd.f32 %v387, %v430
        %v432 = vrot.slane %v431, 2
        %v433 = vadd.f32 %v431, %v432
        %v434 = vrot.slane %v433, 1
        %v435 = vadd.f32 %v433, %v434
        %v436 = vld [vmem:[#allocation2] sm:$0xff]
        %v437 = vld [vmem:[#allocation2 + $0x8] sm:$0xff]
        %v438 = vld [vmem:[#allocation2 + $0x10] sm:$0xff]
        %v439 = vld [vmem:[#allocation2 + $0x18] sm:$0xff]
        %v440 = vld [vmem:[#allocation2 + $0x20] sm:$0xff]
        %v441 = vld [vmem:[#allocation2 + $0x28] sm:$0xff]
        %v442 = vld [vmem:[#allocation2 + $0x30] sm:$0xff]
        %v443 = vld [vmem:[#allocation2 + $0x38] sm:$0xff]
        %v444 = vld [vmem:[#allocation2 + $0x40] sm:$0xff]
        %v445 = vld [vmem:[#allocation2 + $0x48] sm:$0xff]
        %v446 = vld [vmem:[#allocation2 + $0x50] sm:$0xff]
        %v447 = vld [vmem:[#allocation2 + $0x58] sm:$0xff]
        %v448 = vld [vmem:[#allocation2 + $0x60] sm:$0xff]
        %v449 = vld [vmem:[#allocation2 + $0x68] sm:$0xff]
        %v450 = vld [vmem:[#allocation2 + $0x70] sm:$0xff]
        %v451 = vld [vmem:[#allocation2 + $0x78] sm:$0xff]
        %vm460 = vcmask 1041409
        %v461 = vsel %vm460, %v399, %v393
        %vm462 = vcmask 1042434
        %v463 = vsel %vm462, %v405, %v461
        %vm464 = vcmask 1043459
        %v465 = vsel %vm464, %v411, %v463
        %vm466 = vcmask 1044484
        %v467 = vsel %vm466, %v417, %v465
        %vm468 = vcmask 1045509
        %v469 = vsel %vm468, %v423, %v467
        %vm470 = vcmask 1046534
        %v471 = vsel %vm470, %v429, %v469
        %vm472 = vcmask 1047559
        %v473 = vsel %vm472, %v435, %v471
        %475 = vmatprep.subr.mxu0 0.0
        %476 = vmatpush1.msra.mxu0 %v451
        %477 = vmatprep.subr.mxu0 0.0
        %478 = vmatpush1.msra.mxu0 %v450
        %479 = vmatprep.subr.mxu0 0.0
        %480 = vmatpush1.msra.mxu0 %v449
        %481 = vmatprep.subr.mxu0 0.0
        %482 = vmatpush1.msra.mxu0 %v448
        %483 = vmatprep.subr.mxu0 0.0
        %484 = vmatpush1.msra.mxu0 %v447
        %485 = vmatprep.subr.mxu0 0.0
        %486 = vmatpush1.msra.mxu0 %v446
        %487 = vmatprep.subr.mxu0 0.0
        %488 = vmatpush1.msra.mxu0 %v445
        %489 = vmatprep.subr.mxu0 0.0
        %490 = vmatpush1.msra.mxu0 %v444
        %491 = vmatprep.subr.mxu0 0.0
        %492 = vmatpush1.msra.mxu0 %v443
        %493 = vmatprep.subr.mxu0 0.0
        %494 = vmatpush1.msra.mxu0 %v442
        %495 = vmatprep.subr.mxu0 0.0
        %496 = vmatpush1.msra.mxu0 %v441
        %497 = vmatprep.subr.mxu0 0.0
        %498 = vmatpush1.msra.mxu0 %v440
        %499 = vmatprep.subr.mxu0 0.0
        %500 = vmatpush1.msra.mxu0 %v439
        %501 = vmatprep.subr.mxu0 0.0
        %502 = vmatpush1.msra.mxu0 %v438
        %503 = vmatprep.subr.mxu0 0.0
        %504 = vmatpush1.msra.mxu0 %v437
        %505 = vmatprep.subr.mxu0 0.0
        %506 = vmatpush1.msra.mxu0 %v436
        %507 = vmatprep.subr.mxu0 0.0
        %508 = vmatpush2.msra.mxu0 0.0
        %509 = vmatprep.subr.mxu0 0.0
        %510 = vmatpush2.msra.mxu0 0.0
        %511 = vmatprep.subr.mxu0 0.0
        %512 = vmatpush2.msra.mxu0 0.0
        %513 = vmatprep.subr.mxu0 0.0
        %514 = vmatpush2.msra.mxu0 0.0
        %515 = vmatprep.subr.mxu0 0.0
        %516 = vmatpush2.msra.mxu0 0.0
        %517 = vmatprep.subr.mxu0 0.0
        %518 = vmatpush2.msra.mxu0 0.0
        %519 = vmatprep.subr.mxu0 0.0
        %520 = vmatpush2.msra.mxu0 0.0
        %521 = vmatprep.subr.mxu0 0.0
        %522 = vmatpush2.msra.mxu0 0.0
        %523 = vmatprep.subr.mxu0 0.0
        %524 = vmatpush2.msra.mxu0 0.0
        %525 = vmatprep.subr.mxu0 0.0
        %526 = vmatpush2.msra.mxu0 0.0
        %527 = vmatprep.subr.mxu0 0.0
        %528 = vmatpush2.msra.mxu0 0.0
        %529 = vmatprep.subr.mxu0 0.0
        %530 = vmatpush2.msra.mxu0 0.0
        %531 = vmatprep.subr.mxu0 0.0
        %532 = vmatpush2.msra.mxu0 0.0
        %533 = vmatprep.subr.mxu0 0.0
        %534 = vmatpush2.msra.mxu0 0.0
        %535 = vmatprep.subr.mxu0 0.0
        %536 = vmatpush2.msra.mxu0 0.0
        %537 = vmatprep.subr.mxu0 0.0
        %538 = vmatpush2.msra.mxu0 0.0
        %539 = vmatprep.mubr.f32.mxu0 0.0
        %540 = vmatmul.mubr.f32.gmra.mxu0 %v473
        %v541 = vpop.f32.mrf.mxu0
        %v542 = vadd.f32 0.0, %v541
        %v543 = vpop.f32.mrf.mxu0
        %544 = vdwg.mxu0
        %vm545 = vcmask 64512
        %v546 = vsel %vm545, %v241, 0.0
        %547 = vadd.xlane.f32.xlu0 %v546
        %v548 = vpop.xlane.xlu0 %547
        %v549 = vmax.f32 %v548, 1e-09
        %v550 = vrcp.pop %v549
        %v551 = vmul.f32 %v542, %v550
        %v552 = vld [vmem:[#allocation5] sm:$0xff]
        %v553 = vld [vmem:[#allocation5 + $0x8] sm:$0xff]
        %v554 = vld [vmem:[#allocation5 + $0x10] sm:$0xff]
        %v555 = vld [vmem:[#allocation5 + $0x18] sm:$0xff]
        %v556 = vld [vmem:[#allocation5 + $0x20] sm:$0xff]
        %v557 = vld [vmem:[#allocation5 + $0x28] sm:$0xff]
        %v558 = vld [vmem:[#allocation5 + $0x30] sm:$0xff]
        %v559 = vld [vmem:[#allocation5 + $0x38] sm:$0xff]
        %v560 = vld [vmem:[#allocation5 + $0x40] sm:$0xff]
        %v561 = vld [vmem:[#allocation5 + $0x48] sm:$0xff]
        %v562 = vld [vmem:[#allocation5 + $0x50] sm:$0xff]
        %v563 = vld [vmem:[#allocation5 + $0x58] sm:$0xff]
        %v564 = vld [vmem:[#allocation5 + $0x60] sm:$0xff]
        %v565 = vld [vmem:[#allocation5 + $0x68] sm:$0xff]
        %v566 = vld [vmem:[#allocation5 + $0x70] sm:$0xff]
        %v567 = vld [vmem:[#allocation5 + $0x78] sm:$0xff]
        %568 = vmatprep.subr.mxu0 0.0
        %569 = vmatpush1.msra.mxu0 %v567
        %570 = vmatprep.subr.mxu0 0.0
        %571 = vmatpush1.msra.mxu0 %v566
        %572 = vmatprep.subr.mxu0 0.0
        %573 = vmatpush1.msra.mxu0 %v565
        %574 = vmatprep.subr.mxu0 0.0
        %575 = vmatpush1.msra.mxu0 %v564
        %576 = vmatprep.subr.mxu0 0.0
        %577 = vmatpush1.msra.mxu0 %v563
        %578 = vmatprep.subr.mxu0 0.0
        %579 = vmatpush1.msra.mxu0 %v562
        %580 = vmatprep.subr.mxu0 0.0
        %581 = vmatpush1.msra.mxu0 %v561
        %582 = vmatprep.subr.mxu0 0.0
        %583 = vmatpush1.msra.mxu0 %v560
        %584 = vmatprep.subr.mxu0 0.0
        %585 = vmatpush1.msra.mxu0 %v559
        %586 = vmatprep.subr.mxu0 0.0
        %587 = vmatpush1.msra.mxu0 %v558
        %588 = vmatprep.subr.mxu0 0.0
        %589 = vmatpush1.msra.mxu0 %v557
        %590 = vmatprep.subr.mxu0 0.0
        %591 = vmatpush1.msra.mxu0 %v556
        %592 = vmatprep.subr.mxu0 0.0
        %593 = vmatpush1.msra.mxu0 %v555
        %594 = vmatprep.subr.mxu0 0.0
        %595 = vmatpush1.msra.mxu0 %v554
        %596 = vmatprep.subr.mxu0 0.0
        %597 = vmatpush1.msra.mxu0 %v553
        %598 = vmatprep.subr.mxu0 0.0
        %599 = vmatpush1.msra.mxu0 %v552
        %600 = vmatprep.subr.mxu0 0.0
        %601 = vmatpush2.msra.mxu0 0.0
        %602 = vmatprep.subr.mxu0 0.0
        %603 = vmatpush2.msra.mxu0 0.0
        %604 = vmatprep.subr.mxu0 0.0
        %605 = vmatpush2.msra.mxu0 0.0
        %606 = vmatprep.subr.mxu0 0.0
        %607 = vmatpush2.msra.mxu0 0.0
        %608 = vmatprep.subr.mxu0 0.0
        %609 = vmatpush2.msra.mxu0 0.0
        %610 = vmatprep.subr.mxu0 0.0
        %611 = vmatpush2.msra.mxu0 0.0
        %612 = vmatprep.subr.mxu0 0.0
        %613 = vmatpush2.msra.mxu0 0.0
        %614 = vmatprep.subr.mxu0 0.0
        %615 = vmatpush2.msra.mxu0 0.0
        %616 = vmatprep.subr.mxu0 0.0
        %617 = vmatpush2.msra.mxu0 0.0
        %618 = vmatprep.subr.mxu0 0.0
        %619 = vmatpush2.msra.mxu0 0.0
        %620 = vmatprep.subr.mxu0 0.0
        %621 = vmatpush2.msra.mxu0 0.0
        %622 = vmatprep.subr.mxu0 0.0
        %623 = vmatpush2.msra.mxu0 0.0
        %624 = vmatprep.subr.mxu0 0.0
        %625 = vmatpush2.msra.mxu0 0.0
        %626 = vmatprep.subr.mxu0 0.0
        %627 = vmatpush2.msra.mxu0 0.0
        %628 = vmatprep.subr.mxu0 0.0
        %629 = vmatpush2.msra.mxu0 0.0
        %630 = vmatprep.subr.mxu0 0.0
        %631 = vmatpush2.msra.mxu0 0.0
        %632 = vmatprep.mubr.f32.mxu0 0.0
        %633 = vmatmul.mubr.f32.gmra.mxu0 %v551
        %v634 = vpop.f32.mrf.mxu0
        %v635 = vadd.f32 0.0, %v634
        %v636 = vpop.f32.mrf.mxu0
        %637 = vdwg.mxu0
        %638 = vst [vmem:[%s231] sm:$0xff] %v635
        %s639 = sand.u32 %s122, 1
        %s640 = scalar_lea.sflag [#allocation4], %s639
        %s641 = sand.u32 %s122, 1
        %s642 = smul.addr %s641, 8
        %s643 = scalar_lea.vmem [#allocation7], %s642
        // Predicated region
        $region45: #{tpu_custom_call.1} parent=35 // pred_check
          %p644 = pneg %p132
        $region46: #{tpu_custom_call.1} parent=35 // pred_check_branch
          %646 = sbr.rel (%p644) target = $region48
        $region47: #{tpu_custom_call.1} parent=35 // pred_region
          %s648 = ssub.s32 128, 128
          %649 = vsyncadd %s640, %s648
          %s650 = smul.addr %s20, 128
          %s651 = scalar_lea.hbm %s4, %s650
          %s653 = sshll.u32 %s643, 4
          %s654 = int_to_ptr.vmem [resolvable:$true] %s653
          %656 = dma.vmem_to_hbm [thread:$0]  %s654, 128, %s651, %s640
        $region48: #{tpu_custom_call.1} parent=35 // pred_fallthru
          _
      $region36: #{tpu_custom_call.1} parent=5 // pred_fallthru
        _
      %p657 = scmp.le.s32.totalorder 2, %s15
      // Predicated region
      $region49: #{tpu_custom_call.1} parent=5 // pred_check
        %p658 = pneg %p657
      $region50: #{tpu_custom_call.1} parent=5 // pred_check_branch
        %660 = sbr.rel (%p658) target = $region52
      $region51: #{tpu_custom_call.1} parent=5 // pred_region
        %s661 = ssub.s32 %s15, 2
        // Predicated region
        $region53: #{tpu_custom_call.1} parent=51 // pred_check
          %p662 = pneg %p138
        $region54: #{tpu_custom_call.1} parent=51 // pred_check_branch
          %664 = sbr.rel (%p662) target = $region56
        $region55: #{tpu_custom_call.1} parent=51 // pred_region
          %s665 = sand.u32 %s123, 1
          %s666 = scalar_lea.sflag [#allocation4], %s665
          %s667 = sand.u32 %s123, 1
          %s668 = smul.addr %s667, 8
          %s669 = scalar_lea.vmem [#allocation7], %s668
          %670 = dma.done %s666, 128
        $region56: #{tpu_custom_call.1} parent=51 // pred_fallthru
          _
      $region52: #{tpu_custom_call.1} parent=5 // pred_fallthru
        _
    $region6: #{tpu_custom_call.1} parent=1 // loop_footer
      %s19 = sadd.s32 1, %s15
    $region7: #{tpu_custom_call.1} parent=1 // loop_footer_branch
      %14 = sbr.rel target = $region3
    $region8: #{tpu_custom_call.1} parent=1 // loop_exit
      _
    %671 = vsyncpa [#allocation3], 1
    %s672 = scalar_lea.sflag [#allocation3], 1
    %673 = vsyncpa %s672, 1
    %674 = vsyncpa [#allocation6], 1
    %675 = vsyncpa [#allocation4], 1
    %s676 = scalar_lea.sflag [#allocation4], 1
    %677 = vsyncpa %s676, 1

</llo_original>
